<compile_context>
chip_gen: v6e
topology: v6e:2x2x1
jax: 0.10.0
libtpu: 0.0.40
codegen_flags: <defaults>
</compile_context>

<pallas_src>
import functools

import jax
import jax.numpy as jnp
from jax.experimental import pallas as pl
from jax.experimental.pallas import tpu as pltpu


def _elu(v):
    # torch.nn.ELU(alpha=1.0).  exp(min(v,0)) - 1 is used instead of expm1 to
    # guarantee Mosaic lowering; the cancellation error is <= ~1e-7 absolute,
    # far below the matmul precision used here.
    return jnp.where(v > 0.0, v, jnp.exp(jnp.minimum(v, 0.0)) - 1.0)


def block_kernel(x_ref, wa_ref, ba_ref, wb_ref, bb_ref, o_ref, *, tb, mm_dtype):
    """One batch tile (tb batch elements) per grid step.

    x_ref : (tb, C_in, L)   activations
    wa_ref: (C1, 3*C_in)    layer-a pre-folded weights (mm_dtype)
    ba_ref: (C1, 1)         layer-a bias (f32)
    wb_ref: (C2, 3*C1)      layer-b pre-folded weights (mm_dtype)
    bb_ref: (C2, 1)         layer-b bias (f32)
    o_ref : (tb, C2, L)     output block in its FINAL layout (no wrapper transpose)
    """
    L = x_ref.shape[-1]
    wa = wa_ref[...]
    wb = wb_ref[...]
    ba = ba_ref[...].astype(jnp.float32)
    bb = bb_ref[...].astype(jnp.float32)

    def sconv(h, w_eff, b_col):
        # circular padding=1, ksize=3:
        #   y[l] = W0 @ h[(l-1)%L] + W1 @ h[l] + W2 @ h[(l+1)%L]
        # -> 2 XLU rolls + ONE fused matmul with K = 3*C (column order of w_eff
        #    matches this [h(l-1); h(l); h(l+1)] row stacking).
        h_m1 = pltpu.roll(h, 1, axis=1)          # h[(l-1) % L]
        h_p1 = pltpu.roll(h, L - 1, axis=1)      # h[(l+1) % L]
        hs = jnp.concatenate([h_m1, h, h_p1], axis=0)            # (3C, L)
        y = jnp.dot(w_eff, hs, preferred_element_type=jnp.float32)
        return y + b_col                                          # lane broadcast

    # Static unroll over the batch tile: leading-axis indexing selects whole
    # (C, L) tiles (no lane relayout); stores are lane-dense when L % 128 == 0.
    for t in range(tb):
        h0 = x_ref[t].astype(mm_dtype)                            # (C_in, L)
        h1 = _elu(sconv(h0, wa, ba))                              # (C1, L) f32
        h2 = _elu(sconv(h1.astype(mm_dtype), wb, bb))             # (C2, L) f32
        o_ref[t] = h2.astype(o_ref.dtype)


def _fold_weights(w, dx, ps):
    """Fold dx**p, the sum over ps and the 3 taps into one (C_out, 3*C_in) weight.

    w: (n_ps, C_out, C_in, 3) -- torch Conv1d-layout weights stacked over ps.
    """
    w = w.astype(jnp.float32)
    scale = jnp.stack([jnp.asarray(dx, jnp.float32) ** p for p in ps])     # (n_ps,)
    w_eff = jnp.einsum("p,poik->oik", scale, w)                            # (C_out, C_in, 3)
    # column order matches the [h(l-1); h(l); h(l+1)] row stacking in the kernel
    return jnp.concatenate([w_eff[..., 0], w_eff[..., 1], w_eff[..., 2]], axis=1)


def _vmem_bytes_estimate(tb, C_in, C1, C2, L, in_bytes, out_bytes, mm_bytes):
    io = 2 * tb * C_in * L * in_bytes + 2 * tb * C2 * L * out_bytes   # double-buffered blocks
    w = (C1 * 3 * C_in + C2 * 3 * C1) * mm_bytes + (C1 + C2) * 4
    live = L * ((3 * C_in + 3 * C1) * mm_bytes + (C1 + C2) * 4)
    return io + w + live


# Conservative per-step working-set budget: fits v7x's 64 MiB physical VMEM
# (32 MiB scoped default) with headroom; v5e/v6e (128 MiB) could go ~2x larger.
_VMEM_BUDGET_BYTES = 24 * 1024 * 1024


def _pick_batch_tile(B, est_fn):
    divisors = [t for t in range(B, 0, -1) if B % t == 0]
    # Prefer >= 2 grid steps so both v7x TensorCores get work.
    preferred = [t for t in divisors if B // t >= 2] or divisors
    for t in preferred:
        if est_fn(t) <= _VMEM_BUDGET_BYTES:
            return t
    return 1


def block_forward(x, params, dx, *, ps=(0, -1), mode=None, batch_tile=None,
                  mm_dtype=jnp.float32):
    """Forward pass of `block`: ELU(conv_a(x, dx)) -> ELU(conv_b(., dx)) -> resample.

    mm_dtype=jnp.bfloat16 halves the VMEM/DMA cost of the stacked intermediates
    (recommended on v6e/v7x); keep jnp.float32 if the dx**p-folded taps span a
    large dynamic range.
    """
    B, C_in, L = x.shape
    wa, ba = params["wa"], params["ba"]
    wb, bb = params["wb"], params["bb"]
    n_ps = len(ps)
    assert wa.shape[0] == n_ps and wb.shape[0] == n_ps, (wa.shape, wb.shape, ps)
    C1 = wa.shape[1]
    C2 = wb.shape[1]
    if any(p < 0 for p in ps) and isinstance(dx, (int, float)):
        assert dx != 0.0, "dx must be nonzero when ps contains negative powers"

    # Weight fold hoisted out of the grid loop (runs once, tiny XLA op).
    # NOTE: for production channel counts, padding C_out / 3*C_in up to MXU
    # tile multiples here would further improve MXU utilization.
    wa_eff = _fold_weights(wa, dx, ps).astype(mm_dtype)     # (C1, 3*C_in)
    wb_eff = _fold_weights(wb, dx, ps).astype(mm_dtype)     # (C2, 3*C1)
    ba_col = ba.reshape(C1, 1).astype(jnp.float32)
    bb_col = bb.reshape(C2, 1).astype(jnp.float32)

    in_b = x.dtype.itemsize
    mm_b = jnp.dtype(mm_dtype).itemsize
    est = functools.partial(_vmem_bytes_estimate, C_in=C_in, C1=C1, C2=C2,
                            L=L, in_bytes=in_b, out_bytes=in_b, mm_bytes=mm_b)
    if batch_tile is None:
        batch_tile = _pick_batch_tile(B, est)
    tb = batch_tile
    assert B % tb == 0, (B, tb)
    nbt = B // tb

    kernel = functools.partial(block_kernel, tb=tb, mm_dtype=mm_dtype)
    vmem_limit = int(min(48 * 1024 * 1024, max(32 * 1024 * 1024, 2 * est(tb))))

    out = pl.pallas_call(
        kernel,
        out_shape=jax.ShapeDtypeStruct((B, C2, L), x.dtype),
        grid=(nbt,),
        in_specs=[
            pl.BlockSpec((tb, C_in, L), lambda b: (b, 0, 0)),
            pl.BlockSpec((C1, 3 * C_in), lambda b: (0, 0)),
            pl.BlockSpec((C1, 1), lambda b: (0, 0)),
            pl.BlockSpec((C2, 3 * C1), lambda b: (0, 0)),
            pl.BlockSpec((C2, 1), lambda b: (0, 0)),
        ],
        out_specs=pl.BlockSpec((tb, C2, L), lambda b: (b, 0, 0)),
        compiler_params=pltpu.CompilerParams(
            dimension_semantics=("parallel",),
            vmem_limit_bytes=vmem_limit),
    )(x, wa_eff, ba_col, wb_eff, bb_col)

    # Resample glue: pure data movement kept outside the kernel.
    if mode == "down":          # nn.AvgPool1d(kernel_size=2, stride=2)
        out = out[:, :, : (L // 2) * 2].reshape(B, C2, L // 2, 2).mean(axis=-1)
    elif mode == "up":
        # Faithful to Upsample1D applied to a (B, C, L) input: x[:, None] is
        # 4-D, so nn.Upsample(scale_factor=2, 'nearest') doubles BOTH C and L.
        out = jnp.repeat(jnp.repeat(out, 2, axis=1), 2, axis=2)
    return out


def init_params(key, in_channels, out_channels, ps, bias_scale=0.3):
    """Deterministic synthetic parameters, torch Conv1d layout (n_ps, C_out, C_in, 3).

    NOTE: torch initializes the bias as 0.0001*randn; a larger synthetic bias
    is used here so the correctness check actually exercises the bias path.
    """
    n_ps = len(ps)
    k = jax.random.split(key, 4)
    wa = 0.1 * jax.random.normal(k[0], (n_ps, out_channels, in_channels, 3), jnp.float32)
    wb = 0.1 * jax.random.normal(k[1], (n_ps, out_channels, out_channels, 3), jnp.float32)
    ba = bias_scale * jax.random.normal(k[2], (out_channels,), jnp.float32)
    bb = bias_scale * jax.random.normal(k[3], (out_channels,), jnp.float32)
    return {"wa": wa, "ba": ba, "wb": wb, "bb": bb}


def ref_block(x, params, dx, ps, mode=None):
    """Pure-JAX reference mirroring the PyTorch forward pass."""
    def sconv(h, w, b):
        h_m1 = jnp.roll(h, 1, axis=-1)
        h_p1 = jnp.roll(h, -1, axis=-1)
        y = 0.0
        for i, p in enumerate(ps):
            yp = (jnp.einsum("oc,bcl->bol", w[i, :, :, 0], h_m1, precision="highest")
                  + jnp.einsum("oc,bcl->bol", w[i, :, :, 1], h, precision="highest")
                  + jnp.einsum("oc,bcl->bol", w[i, :, :, 2], h_p1, precision="highest"))
            y = y + yp * (dx ** p)
        return y + b[None, :, None]

    h = jax.nn.elu(sconv(x, params["wa"], params["ba"]))
    h = jax.nn.elu(sconv(h, params["wb"], params["bb"]))
    if mode == "down":
        B, C, L = h.shape
        h = h[:, :, : (L // 2) * 2].reshape(B, C, L // 2, 2).mean(-1)
    elif mode == "up":
        h = jnp.repeat(jnp.repeat(h, 2, axis=1), 2, axis=2)
    return h


if __name__ == "__main__":
    B, C_IN, C_OUT, L = 2, 4, 8, 16
    PS = (0, -1)
    DX = 0.5

    key = jax.random.PRNGKey(0)
    kx, kp = jax.random.split(key)
    x = jax.random.normal(kx, (B, C_IN, L), jnp.float32)
    params = init_params(kp, C_IN, C_OUT, PS)

    configs = [
        # (batch_tile, matmul dtype, resample mode, abs tolerance)
        dict(batch_tile=None, mm_dtype=jnp.float32, mode=None, tol=3e-2),   # auto tb -> 2 grid steps
        dict(batch_tile=2, mm_dtype=jnp.float32, mode=None, tol=3e-2),
        dict(batch_tile=1, mm_dtype=jnp.bfloat16, mode=None, tol=1e-1),
        dict(batch_tile=1, mm_dtype=jnp.float32, mode="down", tol=3e-2),
        dict(batch_tile=2, mm_dtype=jnp.float32, mode="up", tol=3e-2),
    ]
    for cfg in configs:
        out = block_forward(x, params, DX, ps=PS, mode=cfg["mode"],
                            batch_tile=cfg["batch_tile"],
                            mm_dtype=cfg["mm_dtype"])
        out = jax.block_until_ready(out)
        expected = ref_block(x, params, DX, PS, cfg["mode"])
        assert out.shape == expected.shape, (cfg, out.shape, expected.shape)
        err = float(jnp.max(jnp.abs(out - expected)))
        assert err <= cfg["tol"], (cfg, err)

    print("KERNEL_OK")
</pallas_src>

<mosaic_0001>
module attributes {stable_mosaic.version = 11 : i64} {
  func.func @block_kernel(%arg0: i32, %arg1: memref<1x4x16xf32, #tpu.memory_space<vmem>>, %arg2: memref<8x12xf32, #tpu.memory_space<vmem>>, %arg3: memref<8x1xf32, #tpu.memory_space<vmem>>, %arg4: memref<8x24xf32, #tpu.memory_space<vmem>>, %arg5: memref<8x1xf32, #tpu.memory_space<vmem>>, %arg6: memref<1x8x16xf32, #tpu.memory_space<vmem>>) attributes {dimension_semantics = [#tpu.dimension_semantics<parallel>], iteration_bounds = array<i64: 2>, scalar_prefetch = 0 : i64, scratch_operands = 0 : i64, tpu.core_type = #tpu.core_type<tc>, window_params = [{transform_indices = @transform_0, window_bounds = array<i64: 1, 4, 16>}, {pipeline_mode = #tpu.pipeline_mode<synchronous>, transform_indices = @transform_1, window_bounds = array<i64: 8, 12>}, {pipeline_mode = #tpu.pipeline_mode<synchronous>, transform_indices = @transform_2, window_bounds = array<i64: 8, 1>}, {pipeline_mode = #tpu.pipeline_mode<synchronous>, transform_indices = @transform_3, window_bounds = array<i64: 8, 24>}, {pipeline_mode = #tpu.pipeline_mode<synchronous>, transform_indices = @transform_4, window_bounds = array<i64: 8, 1>}, {transform_indices = @transform_5, window_bounds = array<i64: 1, 8, 16>}]} {
    %c0 = arith.constant 0 : index
    %c0_0 = arith.constant 0 : index
    %0 = vector.load %arg2[%c0, %c0_0] : memref<8x12xf32, #tpu.memory_space<vmem>>, vector<8x12xf32>
    %c0_1 = arith.constant 0 : index
    %c0_2 = arith.constant 0 : index
    %1 = vector.load %arg4[%c0_1, %c0_2] : memref<8x24xf32, #tpu.memory_space<vmem>>, vector<8x24xf32>
    %c0_3 = arith.constant 0 : index
    %c0_4 = arith.constant 0 : index
    %2 = vector.load %arg3[%c0_3, %c0_4] : memref<8x1xf32, #tpu.memory_space<vmem>>, vector<8x1xf32>
    %c0_5 = arith.constant 0 : index
    %c0_6 = arith.constant 0 : index
    %3 = vector.load %arg5[%c0_5, %c0_6] : memref<8x1xf32, #tpu.memory_space<vmem>>, vector<8x1xf32>
    %c0_7 = arith.constant 0 : index
    %c0_8 = arith.constant 0 : index
    %c0_9 = arith.constant 0 : index
    %4 = vector.load %arg1[%c0_7, %c0_8, %c0_9] : memref<1x4x16xf32, #tpu.memory_space<vmem>>, vector<1x4x16xf32>
    %5 = vector.shape_cast %4 : vector<1x4x16xf32> to vector<4x16xf32>
    %c1_i32 = arith.constant 1 : i32
    %6 = tpu.dynamic_rotate %5 by %c1_i32 dim 1 : vector<4x16xf32>, i32 -> vector<4x16xf32>
    %c15_i32 = arith.constant 15 : i32
    %7 = tpu.dynamic_rotate %5 by %c15_i32 dim 1 : vector<4x16xf32>, i32 -> vector<4x16xf32>
    %8 = tpu.concatenate %6, %5, %7 in 0 : vector<4x16xf32>, vector<4x16xf32>, vector<4x16xf32> -> vector<12x16xf32>
    %cst = arith.constant dense<0.000000e+00> : vector<8x16xf32>
    %9 = tpu.matmul %0, %8, %cst {dimension_numbers = #tpu.dot_dimension_numbers<[1], [0], [0], [1], [0, 0, 1, 1], [], []>} : vector<8x12xf32>, vector<12x16xf32>, vector<8x16xf32> -> vector<8x16xf32>
    %10 = vector.broadcast %2 : vector<8x1xf32> to vector<8x16xf32>
    %11 = arith.addf %9, %10 : vector<8x16xf32>
    %cst_10 = arith.constant 0.000000e+00 : f32
    %12 = vector.broadcast %cst_10 : f32 to vector<8x16xf32>
    %13 = arith.cmpf ogt, %11, %12 : vector<8x16xf32>
    %cst_11 = arith.constant 0.000000e+00 : f32
    %14 = vector.broadcast %cst_11 : f32 to vector<8x16xf32>
    %15 = arith.minimumf %11, %14 : vector<8x16xf32>
    %16 = math.exp %15 : vector<8x16xf32>
    %cst_12 = arith.constant 1.000000e+00 : f32
    %17 = vector.broadcast %cst_12 : f32 to vector<8x16xf32>
    %18 = arith.subf %16, %17 : vector<8x16xf32>
    %19 = arith.select %13, %11, %18 : vector<8x16xi1>, vector<8x16xf32>
    %c1_i32_13 = arith.constant 1 : i32
    %20 = tpu.dynamic_rotate %19 by %c1_i32_13 dim 1 : vector<8x16xf32>, i32 -> vector<8x16xf32>
    %c15_i32_14 = arith.constant 15 : i32
    %21 = tpu.dynamic_rotate %19 by %c15_i32_14 dim 1 : vector<8x16xf32>, i32 -> vector<8x16xf32>
    %22 = tpu.concatenate %20, %19, %21 in 0 : vector<8x16xf32>, vector<8x16xf32>, vector<8x16xf32> -> vector<24x16xf32>
    %cst_15 = arith.constant dense<0.000000e+00> : vector<8x16xf32>
    %23 = tpu.matmul %1, %22, %cst_15 {dimension_numbers = #tpu.dot_dimension_numbers<[1], [0], [0], [1], [0, 0, 1, 1], [], []>} : vector<8x24xf32>, vector<24x16xf32>, vector<8x16xf32> -> vector<8x16xf32>
    %24 = vector.broadcast %3 : vector<8x1xf32> to vector<8x16xf32>
    %25 = arith.addf %23, %24 : vector<8x16xf32>
    %cst_16 = arith.constant 0.000000e+00 : f32
    %26 = vector.broadcast %cst_16 : f32 to vector<8x16xf32>
    %27 = arith.cmpf ogt, %25, %26 : vector<8x16xf32>
    %cst_17 = arith.constant 0.000000e+00 : f32
    %28 = vector.broadcast %cst_17 : f32 to vector<8x16xf32>
    %29 = arith.minimumf %25, %28 : vector<8x16xf32>
    %30 = math.exp %29 : vector<8x16xf32>
    %cst_18 = arith.constant 1.000000e+00 : f32
    %31 = vector.broadcast %cst_18 : f32 to vector<8x16xf32>
    %32 = arith.subf %30, %31 : vector<8x16xf32>
    %33 = arith.select %27, %25, %32 : vector<8x16xi1>, vector<8x16xf32>
    %c0_19 = arith.constant 0 : index
    %c0_20 = arith.constant 0 : index
    %c0_21 = arith.constant 0 : index
    %34 = vector.load %arg6[%c0_19, %c0_20, %c0_21] : memref<1x8x16xf32, #tpu.memory_space<vmem>>, vector<1x8x16xf32>
    %35 = vector.shape_cast %34 : vector<1x8x16xf32> to vector<8x16xf32>
    %36 = vector.shape_cast %33 : vector<8x16xf32> to vector<1x8x16xf32>
    tpu.vector_store %arg6[%c0_19, %c0_20, %c0_21], %36 {strides = array<i32>} : memref<1x8x16xf32, #tpu.memory_space<vmem>>, vector<1x8x16xf32>,
    return
  }
  func.func @transform_0(%arg0: i32) -> (i32, i32, i32) {
    %c0_i32 = arith.constant 0 : i32
    %c0_i32_0 = arith.constant 0 : i32
    %c0_i32_1 = arith.constant 0 : i32
    return %arg0, %c0_i32, %c0_i32_0 : i32, i32, i32
  }
  func.func @transform_1(%arg0: i32) -> (i32, i32) {
    %c0_i32 = arith.constant 0 : i32
    %c0_i32_0 = arith.constant 0 : i32
    %c0_i32_1 = arith.constant 0 : i32
    return %c0_i32, %c0_i32_0 : i32, i32
  }
  func.func @transform_2(%arg0: i32) -> (i32, i32) {
    %c0_i32 = arith.constant 0 : i32
    %c0_i32_0 = arith.constant 0 : i32
    %c0_i32_1 = arith.constant 0 : i32
    return %c0_i32, %c0_i32_0 : i32, i32
  }
  func.func @transform_3(%arg0: i32) -> (i32, i32) {
    %c0_i32 = arith.constant 0 : i32
    %c0_i32_0 = arith.constant 0 : i32
    %c0_i32_1 = arith.constant 0 : i32
    return %c0_i32, %c0_i32_0 : i32, i32
  }
  func.func @transform_4(%arg0: i32) -> (i32, i32) {
    %c0_i32 = arith.constant 0 : i32
    %c0_i32_0 = arith.constant 0 : i32
    %c0_i32_1 = arith.constant 0 : i32
    return %c0_i32, %c0_i32_0 : i32, i32
  }
  func.func @transform_5(%arg0: i32) -> (i32, i32, i32) {
    %c0_i32 = arith.constant 0 : i32
    %c0_i32_0 = arith.constant 0 : i32
    %c0_i32_1 = arith.constant 0 : i32
    return %arg0, %c0_i32, %c0_i32_0 : i32, i32, i32
  }
}

</mosaic_0001>

<llo_original>
// kernel: tpu_custom_call.1
$region0: #{tpu_custom_call.1}
  #allocation0 [shape = 'u32[]', space=smem, size = 0x4, offset = 0x4, fixed_abs, tag = 'smem constant byte address 0x4 - core index']
  #allocation1 [shape = 'u32[144,128]{1,0:T(1,128)}', space=vmem, size = 0x12000, scoped, tag = 'internal scratch']
  %s0 = inlined_call_operand.vmem [shape: f32[2,4,16], index: 0, kind: input, shape index: {}]
  %s1 = inlined_call_operand.vmem [shape: f32[8,12], index: 1, kind: input, shape index: {}]
  %s2 = inlined_call_operand.vmem [shape: f32[8,1], index: 2, kind: input, shape index: {}]
  %s3 = inlined_call_operand.hbm [shape: f32[8,24], index: 3, kind: input, shape index: {}]
  %s4 = inlined_call_operand.vmem [shape: f32[8,1], index: 4, kind: input, shape index: {}]
  %s5 = inlined_call_operand.hbm [shape: f32[2,8,16], index: 5, kind: output, shape index: {}]
  %s6 = sld [smem:[#allocation0]]
  $region57: #{tpu_custom_call.1} parent=0
    _
  %s8 = ssub.s32 1, %s6
  %s9 = scalar_select 0, %s8, %s6
  $region1: #{tpu_custom_call.1} parent=0
    #allocation2 [shape = 'u8[4096]{0}', space=vmem, size = 0x1000, scoped, tag = 'input window, operand 3, single buffered']
    #allocation3 [shape = 's32[2]{0}', space=sflag, size = 0x8, scoped, tag = 'scoped memory for tpu_custom_call.1']
    #allocation4 [shape = 's32[2]{0}', space=sflag, size = 0x8, scoped, tag = 'scoped memory for tpu_custom_call.1']
    #allocation5 [shape = 'u8[8192]{0}', space=vmem, size = 0x2000, scoped, tag = 'output window, operand 0']
    %10 = vsyncpa [#allocation3], 0
    %11 = vsyncpa [#allocation4], 0
    %s12 = scalar_lea.sflag [#allocation4], 1
    %13 = vsyncpa %s12, 0
    loop: start=0, step=1, limit=4
    $region2: #{tpu_custom_call.1} parent=1 // loop_pre_header
      _
    $region3: #{tpu_custom_call.1} parent=1 // loop_header
      %s15 = sphi 0, %s19
      %p16 = scmp.ge.s32.totalorder %s15, 4
      %s25 = sphi 0, %s27
      %s28 = sphi 0, %s25
      %s29 = sphi 0, %s28
      %s45 = sphi 0, %s29
      %s49 = sphi 0, %s49
      %s51 = sphi 0, %s49
      %s52 = sphi 0, %s51
      %s66 = sphi 0, %s52
      %s70 = sphi 0, %s70
      %s72 = sphi 0, %s70
      %s73 = sphi 0, %s72
      %s87 = sphi 0, %s73
      %s91 = sphi 0, %s91
      %s93 = sphi 0, %s91
      %s94 = sphi 0, %s93
      %s108 = sphi 0, %s94
      %s112 = sphi 0, %s112
      %s114 = sphi 0, %s112
      %s115 = sphi 0, %s114
      %s129 = sphi 0, %s115
      %s135 = sphi 0, %s137
      %s138 = sphi 0, %s135
      %s139 = sphi 0, %s138
      %s155 = sphi 0, %s139
    $region4: #{tpu_custom_call.1} parent=1 // loop_header_branch
      %18 = sbr.rel (%p16) target = $region8
    $region5: #{tpu_custom_call.1} parent=1 // loop_body
      %s20 = ssub.s32 %s15, 1
      %s21 = ssub.s32 %s15, 2
      %s22 = sadd.s32 %s15, 1
      %s23 = ssub.s32 %s15, %s22
      %p24 = scmp.eq.s32.totalorder %s23, 0
      %s26 = sadd.s32 %s25, 1
      %s27 = scalar_select %p24, %s25, %s26
      %p30 = pneg %p24
      %p31 = scmp.eq.s32.totalorder %s15, 1
      %p32 = por %p30, %p31
      %p33 = scmp.ne.s32.totalorder %s25, %s28
      %p34 = scmp.eq.s32.totalorder %s15, 0
      %p35 = por %p33, %p34
      %p36 = scmp.ne.s32.totalorder %s25, %s28
      %p37 = scmp.eq.s32.totalorder %s20, 1
      %p38 = por %p36, %p37
      %p39 = scmp.ne.s32.totalorder %s28, %s29
      %p40 = scmp.eq.s32.totalorder %s20, 0
      %p41 = por %p39, %p40
      %p42 = scmp.ne.s32.totalorder %s28, %s29
      %p43 = scmp.eq.s32.totalorder %s21, 1
      %p44 = por %p42, %p43
      %p46 = scmp.ne.s32.totalorder %s29, %s45
      %p47 = scmp.eq.s32.totalorder %s21, 0
      %p48 = por %p46, %p47
      %s50 = sadd.s32 %s49, 1
      %p53 = scmp.eq.s32.totalorder %s15, 1
      %p54 = scmp.ne.s32.totalorder %s49, %s51
      %p55 = scmp.eq.s32.totalorder %s15, 0
      %p56 = por %p54, %p55
      %p57 = scmp.ne.s32.totalorder %s49, %s51
      %p58 = scmp.eq.s32.totalorder %s20, 1
      %p59 = por %p57, %p58
      %p60 = scmp.ne.s32.totalorder %s51, %s52
      %p61 = scmp.eq.s32.totalorder %s20, 0
      %p62 = por %p60, %p61
      %p63 = scmp.ne.s32.totalorder %s51, %s52
      %p64 = scmp.eq.s32.totalorder %s21, 1
      %p65 = por %p63, %p64
      %p67 = scmp.ne.s32.totalorder %s52, %s66
      %p68 = scmp.eq.s32.totalorder %s21, 0
      %p69 = por %p67, %p68
      %s71 = sadd.s32 %s70, 1
      %p74 = scmp.eq.s32.totalorder %s15, 1
      %p75 = scmp.ne.s32.totalorder %s70, %s72
      %p76 = scmp.eq.s32.totalorder %s15, 0
      %p77 = por %p75, %p76
      %p78 = scmp.ne.s32.totalorder %s70, %s72
      %p79 = scmp.eq.s32.totalorder %s20, 1
      %p80 = por %p78, %p79
      %p81 = scmp.ne.s32.totalorder %s72, %s73
      %p82 = scmp.eq.s32.totalorder %s20, 0
      %p83 = por %p81, %p82
      %p84 = scmp.ne.s32.totalorder %s72, %s73
      %p85 = scmp.eq.s32.totalorder %s21, 1
      %p86 = por %p84, %p85
      %p88 = scmp.ne.s32.totalorder %s73, %s87
      %p89 = scmp.eq.s32.totalorder %s21, 0
      %p90 = por %p88, %p89
      %s92 = sadd.s32 %s91, 1
      %p95 = scmp.eq.s32.totalorder %s15, 1
      %p96 = scmp.ne.s32.totalorder %s91, %s93
      %p97 = scmp.eq.s32.totalorder %s15, 0
      %p98 = por %p96, %p97
      %p99 = scmp.ne.s32.totalorder %s91, %s93
      %p100 = scmp.eq.s32.totalorder %s20, 1
      %p101 = por %p99, %p100
      %p102 = scmp.ne.s32.totalorder %s93, %s94
      %p103 = scmp.eq.s32.totalorder %s20, 0
      %p104 = por %p102, %p103
      %p105 = scmp.ne.s32.totalorder %s93, %s94
      %p106 = scmp.eq.s32.totalorder %s21, 1
      %p107 = por %p105, %p106
      %p109 = scmp.ne.s32.totalorder %s94, %s108
      %p110 = scmp.eq.s32.totalorder %s21, 0
      %p111 = por %p109, %p110
      %s113 = sadd.s32 %s112, 1
      %p116 = scmp.eq.s32.totalorder %s15, 1
      %p117 = scmp.ne.s32.totalorder %s112, %s114
      %p118 = scmp.eq.s32.totalorder %s15, 0
      %p119 = por %p117, %p118
      %p120 = scmp.ne.s32.totalorder %s112, %s114
      %p121 = scmp.eq.s32.totalorder %s20, 1
      %p122 = por %p120, %p121
      %p123 = scmp.ne.s32.totalorder %s114, %s115
      %p124 = scmp.eq.s32.totalorder %s20, 0
      %p125 = por %p123, %p124
      %p126 = scmp.ne.s32.totalorder %s114, %s115
      %p127 = scmp.eq.s32.totalorder %s21, 1
      %p128 = por %p126, %p127
      %p130 = scmp.ne.s32.totalorder %s115, %s129
      %p131 = scmp.eq.s32.totalorder %s21, 0
      %p132 = por %p130, %p131
      %s133 = ssub.s32 %s15, %s22
      %p134 = scmp.eq.s32.totalorder %s133, 0
      %s136 = sadd.s32 %s135, 1
      %s137 = scalar_select %p134, %s135, %s136
      %p140 = pneg %p134
      %p141 = scmp.eq.s32.totalorder %s15, 1
      %p142 = por %p140, %p141
      %p143 = scmp.ne.s32.totalorder %s135, %s138
      %p144 = scmp.eq.s32.totalorder %s15, 0
      %p145 = por %p143, %p144
      %p146 = scmp.ne.s32.totalorder %s135, %s138
      %p147 = scmp.eq.s32.totalorder %s20, 1
      %p148 = por %p146, %p147
      %p149 = scmp.ne.s32.totalorder %s138, %s139
      %p150 = scmp.eq.s32.totalorder %s20, 0
      %p151 = por %p149, %p150
      %p152 = scmp.ne.s32.totalorder %s138, %s139
      %p153 = scmp.eq.s32.totalorder %s21, 1
      %p154 = por %p152, %p153
      %p156 = scmp.ne.s32.totalorder %s139, %s155
      %p157 = scmp.eq.s32.totalorder %s21, 0
      %p158 = por %p156, %p157
      %p159 = scmp.le.s32.totalorder 1, %s15
      %p160 = scmp.lt.s32.totalorder %s15, 3
      %p161 = pnand %p159, %p160
      %p162 = pneg %p161
      // Predicated region
      $region9: #{tpu_custom_call.1} parent=5 // pred_check
        _
      $region10: #{tpu_custom_call.1} parent=5 // pred_check_branch
        %164 = sbr.rel (%p161) target = $region12
      $region11: #{tpu_custom_call.1} parent=5 // pred_region
        %s165 = ssub.s32 %s15, 1
        // Predicated region
        $region13: #{tpu_custom_call.1} parent=11 // pred_check
          %p166 = pneg %p62
        $region14: #{tpu_custom_call.1} parent=11 // pred_check_branch
          %168 = sbr.rel (%p166) target = $region16
        $region15: #{tpu_custom_call.1} parent=11 // pred_region
          _
        $region16: #{tpu_custom_call.1} parent=11 // pred_fallthru
          _
        // Predicated region
        $region17: #{tpu_custom_call.1} parent=11 // pred_check
          %p169 = pneg %p83
        $region18: #{tpu_custom_call.1} parent=11 // pred_check_branch
          %171 = sbr.rel (%p169) target = $region20
        $region19: #{tpu_custom_call.1} parent=11 // pred_region
          _
        $region20: #{tpu_custom_call.1} parent=11 // pred_fallthru
          _
        // Predicated region
        $region21: #{tpu_custom_call.1} parent=11 // pred_check
          %p172 = pneg %p104
        $region22: #{tpu_custom_call.1} parent=11 // pred_check_branch
          %174 = sbr.rel (%p172) target = $region24
        $region23: #{tpu_custom_call.1} parent=11 // pred_region
          %s176 = ssub.s32 128, 128
          %177 = vsyncadd [#allocation3], %s176
          %s179 = sshll.u32 [#allocation2], 4
          %s180 = int_to_ptr.vmem [resolvable:$true] %s179
          %182 = dma.hbm_to_vmem [thread:$0]  %s3, 128, %s180, [#allocation3]
        $region24: #{tpu_custom_call.1} parent=11 // pred_fallthru
          _
        // Predicated region
        $region25: #{tpu_custom_call.1} parent=11 // pred_check
          %p183 = pneg %p125
        $region26: #{tpu_custom_call.1} parent=11 // pred_check_branch
          %185 = sbr.rel (%p183) target = $region28
        $region27: #{tpu_custom_call.1} parent=11 // pred_region
          _
        $region28: #{tpu_custom_call.1} parent=11 // pred_fallthru
          _
      $region12: #{tpu_custom_call.1} parent=5 // pred_fallthru
        _
      %p186 = scmp.lt.s32.totalorder %s15, 2
      // Predicated region
      $region29: #{tpu_custom_call.1} parent=5 // pred_check
        %p187 = pneg %p186
      $region30: #{tpu_custom_call.1} parent=5 // pred_check_branch
        %189 = sbr.rel (%p187) target = $region32
      $region31: #{tpu_custom_call.1} parent=5 // pred_region
        // Predicated region
        $region33: #{tpu_custom_call.1} parent=31 // pred_check
          %p190 = pneg %p35
        $region34: #{tpu_custom_call.1} parent=31 // pred_check_branch
          %192 = sbr.rel (%p190) target = $region36
        $region35: #{tpu_custom_call.1} parent=31 // pred_region
          %p193 = scmp.lt.s32.totalorder %s15, 1
          %s194 = scalar_select %p193, %s15, 1
          %s195 = smul.addr %s194, 4
          %s196 = scalar_lea.vmem %s0, %s195
        $region36: #{tpu_custom_call.1} parent=31 // pred_fallthru
          _
      $region32: #{tpu_custom_call.1} parent=5 // pred_fallthru
        _
      %p197 = scmp.le.s32.totalorder 1, %s15
      %p198 = scmp.lt.s32.totalorder %s15, 3
      %p199 = pnand %p197, %p198
      %p200 = pneg %p199
      // Predicated region
      $region37: #{tpu_custom_call.1} parent=5 // pred_check
        _
      $region38: #{tpu_custom_call.1} parent=5 // pred_check_branch
        %202 = sbr.rel (%p199) target = $region40
      $region39: #{tpu_custom_call.1} parent=5 // pred_region
        %s203 = ssub.s32 %s15, 1
        // Predicated region
        $region41: #{tpu_custom_call.1} parent=39 // pred_check
          %p204 = pneg %p104
        $region42: #{tpu_custom_call.1} parent=39 // pred_check_branch
          %206 = sbr.rel (%p204) target = $region44
        $region43: #{tpu_custom_call.1} parent=39 // pred_region
          %207 = dma.done [#allocation3], 128
        $region44: #{tpu_custom_call.1} parent=39 // pred_fallthru
          _
        %p208 = scmp.lt.s32.totalorder %s20, 1
        %s209 = scalar_select %p208, %s20, 1
        %s210 = smul.addr %s209, 4
        %s211 = scalar_lea.vmem %s0, %s210
        %p212 = pneg %p41
        %p213 = pneg %p38
        %p214 = pneg %p62
        %p215 = pneg %p59
        %p216 = pneg %p83
        %p217 = pneg %p80
        %p218 = pneg %p104
        %p219 = pneg %p101
        %p220 = pneg %p125
        %p221 = pneg %p122
        %p222 = pneg %p151
        %p223 = pneg %p148
        %s224 = sand.u32 %s138, 1
        %s225 = scalar_lea.sflag [#allocation4], %s224
        %s226 = sand.u32 %s138, 1
        %s227 = smul.addr %s226, 8
        %s228 = scalar_lea.vmem [#allocation5], %s227
        %p229 = scmp.lt.s32.totalorder %s20, 1
        %s230 = scalar_select %p229, %s20, 1
        %s231 = smul.addr %s230, 4
        %s232 = scalar_lea.vmem %s0, %s231
        %v233 = vld [vmem:[%s1] sm:$0xff]
        %v234 = vld [vmem:[#allocation2] sm:$0xff]
        %v235 = vld [vmem:[%s2] sm:$0xff]
        %v236 = vld [vmem:[%s4] sm:$0xff]
        %v237 = vld [vmem:[%s232] sm:$0xf]
        %vm238 = vcmask 1047680
        %239 = vrot.lane.b32.xlu0 %v237, 16
        %v240 = vpop.permute.xlu0 %239
        %v241 = vsel %vm238, %v240, %v237
        %242 = vrot.lane.b32.xlu0 %v241, 16
        %v243 = vpop.permute.xlu0 %242
        %v244 = vsel %vm238, %v243, %v237
        %v246 = vrot.slane %v237, 4
        %247 = vrot.lane.b32.xlu0 %v246, 15
        %v248 = vpop.permute.xlu0 %247
        %251 = vrot.lane.b32.xlu0 %v244, 14
        %v252 = vpop.permute.xlu0 %251
        %vm253 = vcmask 1043456
        %v254 = vsel %vm253, %v244, %v248
        %256 = vset.pattern.permute.xlu0 0
        %257 = vperm.xlu0 %256, %v235
        %v258 = vpop.permute.xlu0 %257
        %261 = vrot.lane.b32.xlu0 %v254, 113
        %v262 = vpop.permute.xlu0 %261
        %263 = vrot.lane.b32.xlu0 %v252, 113
        %v264 = vpop.permute.xlu0 %263
        %vm266 = vcmask 97280
        %v268 = vsel %vm266, %v233, 0
        %v270 = vsel %vm253, %v264, 0
        %272 = vmatprep.subr.mxu0 0.0
        %273 = vmatpush1.msra.mxu0 0.0
        %274 = vmatprep.subr.mxu0 0.0
        %275 = vmatpush1.msra.mxu0 0.0
        %276 = vmatprep.subr.mxu0 0.0
        %277 = vmatpush1.msra.mxu0 0.0
        %278 = vmatprep.subr.mxu0 0.0
        %279 = vmatpush1.msra.mxu0 0.0
        %280 = vmatprep.subr.mxu0 0.0
        %281 = vmatpush1.msra.mxu0 0.0
        %282 = vmatprep.subr.mxu0 0.0
        %283 = vmatpush1.msra.mxu0 0.0
        %284 = vmatprep.subr.mxu0 0.0
        %285 = vmatpush1.msra.mxu0 0.0
        %286 = vmatprep.subr.mxu0 0.0
        %287 = vmatpush1.msra.mxu0 0.0
        %288 = vmatprep.subr.mxu0 0.0
        %289 = vmatpush1.msra.mxu0 0.0
        %290 = vmatprep.subr.mxu0 0.0
        %291 = vmatpush1.msra.mxu0 0.0
        %292 = vmatprep.subr.mxu0 0.0
        %293 = vmatpush1.msra.mxu0 0.0
        %294 = vmatprep.subr.mxu0 0.0
        %295 = vmatpush1.msra.mxu0 0.0
        %296 = vmatprep.subr.mxu0 0.0
        %297 = vmatpush1.msra.mxu0 0.0
        %298 = vmatprep.subr.mxu0 0.0
        %299 = vmatpush1.msra.mxu0 0.0
        %300 = vmatprep.subr.mxu0 0.0
        %301 = vmatpush1.msra.mxu0 %v270
        %302 = vmatprep.subr.mxu0 0.0
        %303 = vmatpush1.msra.mxu0 %v262
        %304 = vmatprep.subr.mxu0 0.0
        %305 = vmatpush2.msra.mxu0 0.0
        %306 = vmatprep.subr.mxu0 0.0
        %307 = vmatpush2.msra.mxu0 0.0
        %308 = vmatprep.subr.mxu0 0.0
        %309 = vmatpush2.msra.mxu0 0.0
        %310 = vmatprep.subr.mxu0 0.0
        %311 = vmatpush2.msra.mxu0 0.0
        %312 = vmatprep.subr.mxu0 0.0
        %313 = vmatpush2.msra.mxu0 0.0
        %314 = vmatprep.subr.mxu0 0.0
        %315 = vmatpush2.msra.mxu0 0.0
        %316 = vmatprep.subr.mxu0 0.0
        %317 = vmatpush2.msra.mxu0 0.0
        %318 = vmatprep.subr.mxu0 0.0
        %319 = vmatpush2.msra.mxu0 0.0
        %320 = vmatprep.subr.mxu0 0.0
        %321 = vmatpush2.msra.mxu0 0.0
        %322 = vmatprep.subr.mxu0 0.0
        %323 = vmatpush2.msra.mxu0 0.0
        %324 = vmatprep.subr.mxu0 0.0
        %325 = vmatpush2.msra.mxu0 0.0
        %326 = vmatprep.subr.mxu0 0.0
        %327 = vmatpush2.msra.mxu0 0.0
        %328 = vmatprep.subr.mxu0 0.0
        %329 = vmatpush2.msra.mxu0 0.0
        %330 = vmatprep.subr.mxu0 0.0
        %331 = vmatpush2.msra.mxu0 0.0
        %332 = vmatprep.subr.mxu0 0.0
        %333 = vmatpush2.msra.mxu0 0.0
        %334 = vmatprep.subr.mxu0 0.0
        %335 = vmatpush2.msra.mxu0 0.0
        %336 = vmatprep.mubr.f32.mxu0 0.0
        %337 = vmatmul.mubr.f32.gmra.mxu0 %v268
        %v338 = vpop.f32.mrf.mxu0
        %v339 = vadd.f32 %v258, %v338
        %v340 = vpop.f32.mrf.mxu0
        %341 = vdwg.mxu0
        %vm342 = vcmp.gt.f32.partialorder %v339, 0.0
        %v343 = vmin.f32 %v339, 0.0
        %v344 = vmul.f32 %v343, 1.442695
        %v345 = vpow.pop %v344
        %v346 = vsub.f32 %v345, 1.0
        %v347 = vsel %vm342, %v339, %v346
        %348 = vrot.lane.b32.xlu0 %v347, 16
        %v349 = vpop.permute.xlu0 %348
        %v350 = vsel %vm238, %v349, %v347
        %351 = vrot.lane.b32.xlu0 %v350, 16
        %v352 = vpop.permute.xlu0 %351
        %v353 = vsel %vm238, %v352, %v347
        %355 = vrot.lane.b32.xlu0 %v347, 15
        %v356 = vpop.permute.xlu0 %355
        %358 = vrot.lane.b32.xlu0 %v353, 14
        %v359 = vpop.permute.xlu0 %358
        %361 = vset.pattern.permute.xlu0 0
        %362 = vperm.xlu0 %361, %v236
        %v363 = vpop.permute.xlu0 %362
        %365 = vrot.lane.b32.xlu0 %v353, 113
        %v366 = vpop.permute.xlu0 %365
        %367 = vrot.lane.b32.xlu0 %v356, 113
        %v368 = vpop.permute.xlu0 %367
        %369 = vrot.lane.b32.xlu0 %v359, 113
        %v370 = vpop.permute.xlu0 %369
        %vm374 = vcmask 195584
        %v376 = vsel %vm374, %v234, 0
        %378 = vmatprep.subr.mxu0 0.0
        %379 = vmatpush1.msra.mxu0 0.0
        %380 = vmatprep.subr.mxu0 0.0
        %381 = vmatpush1.msra.mxu0 0.0
        %382 = vmatprep.subr.mxu0 0.0
        %383 = vmatpush1.msra.mxu0 0.0
        %384 = vmatprep.subr.mxu0 0.0
        %385 = vmatpush1.msra.mxu0 0.0
        %386 = vmatprep.subr.mxu0 0.0
        %387 = vmatpush1.msra.mxu0 0.0
        %388 = vmatprep.subr.mxu0 0.0
        %389 = vmatpush1.msra.mxu0 0.0
        %390 = vmatprep.subr.mxu0 0.0
        %391 = vmatpush1.msra.mxu0 0.0
        %392 = vmatprep.subr.mxu0 0.0
        %393 = vmatpush1.msra.mxu0 0.0
        %394 = vmatprep.subr.mxu0 0.0
        %395 = vmatpush1.msra.mxu0 0.0
        %396 = vmatprep.subr.mxu0 0.0
        %397 = vmatpush1.msra.mxu0 0.0
        %398 = vmatprep.subr.mxu0 0.0
        %399 = vmatpush1.msra.mxu0 0.0
        %400 = vmatprep.subr.mxu0 0.0
        %401 = vmatpush1.msra.mxu0 0.0
        %402 = vmatprep.subr.mxu0 0.0
        %403 = vmatpush1.msra.mxu0 0.0
        %404 = vmatprep.subr.mxu0 0.0
        %405 = vmatpush1.msra.mxu0 %v370
        %406 = vmatprep.subr.mxu0 0.0
        %407 = vmatpush1.msra.mxu0 %v368
        %408 = vmatprep.subr.mxu0 0.0
        %409 = vmatpush1.msra.mxu0 %v366
        %410 = vmatprep.subr.mxu0 0.0
        %411 = vmatpush2.msra.mxu0 0.0
        %412 = vmatprep.subr.mxu0 0.0
        %413 = vmatpush2.msra.mxu0 0.0
        %414 = vmatprep.subr.mxu0 0.0
        %415 = vmatpush2.msra.mxu0 0.0
        %416 = vmatprep.subr.mxu0 0.0
        %417 = vmatpush2.msra.mxu0 0.0
        %418 = vmatprep.subr.mxu0 0.0
        %419 = vmatpush2.msra.mxu0 0.0
        %420 = vmatprep.subr.mxu0 0.0
        %421 = vmatpush2.msra.mxu0 0.0
        %422 = vmatprep.subr.mxu0 0.0
        %423 = vmatpush2.msra.mxu0 0.0
        %424 = vmatprep.subr.mxu0 0.0
        %425 = vmatpush2.msra.mxu0 0.0
        %426 = vmatprep.subr.mxu0 0.0
        %427 = vmatpush2.msra.mxu0 0.0
        %428 = vmatprep.subr.mxu0 0.0
        %429 = vmatpush2.msra.mxu0 0.0
        %430 = vmatprep.subr.mxu0 0.0
        %431 = vmatpush2.msra.mxu0 0.0
        %432 = vmatprep.subr.mxu0 0.0
        %433 = vmatpush2.msra.mxu0 0.0
        %434 = vmatprep.subr.mxu0 0.0
        %435 = vmatpush2.msra.mxu0 0.0
        %436 = vmatprep.subr.mxu0 0.0
        %437 = vmatpush2.msra.mxu0 0.0
        %438 = vmatprep.subr.mxu0 0.0
        %439 = vmatpush2.msra.mxu0 0.0
        %440 = vmatprep.subr.mxu0 0.0
        %441 = vmatpush2.msra.mxu0 0.0
        %442 = vmatprep.mubr.f32.mxu0 0.0
        %443 = vmatmul.mubr.f32.gmra.mxu0 %v376
        %v444 = vpop.f32.mrf.mxu0
        %v445 = vadd.f32 %v363, %v444
        %v446 = vpop.f32.mrf.mxu0
        %447 = vdwg.mxu0
        %vm448 = vcmp.gt.f32.partialorder %v445, 0.0
        %v449 = vmin.f32 %v445, 0.0
        %v450 = vmul.f32 %v449, 1.442695
        %v451 = vpow.pop %v450
        %v452 = vsub.f32 %v451, 1.0
        %v453 = vsel %vm448, %v445, %v452
        %vm454 = vcmask 130048
        %455 = vst.msk [vmem:[%s228] sm:$0xff] %vm454, %v453
        %s456 = sand.u32 %s138, 1
        %s457 = scalar_lea.sflag [#allocation4], %s456
        %s458 = sand.u32 %s138, 1
        %s459 = smul.addr %s458, 8
        %s460 = scalar_lea.vmem [#allocation5], %s459
        // Predicated region
        $region45: #{tpu_custom_call.1} parent=39 // pred_check
          %p461 = pneg %p148
        $region46: #{tpu_custom_call.1} parent=39 // pred_check_branch
          %463 = sbr.rel (%p461) target = $region48
        $region47: #{tpu_custom_call.1} parent=39 // pred_region
          %s465 = ssub.s32 128, 128
          %466 = vsyncadd %s457, %s465
          %s467 = smul.addr %s20, 128
          %s468 = scalar_lea.hbm %s5, %s467
          %s470 = sshll.u32 %s460, 4
          %s471 = int_to_ptr.vmem [resolvable:$true] %s470
          %473 = dma.vmem_to_hbm [thread:$0]  %s471, 128, %s468, %s457
        $region48: #{tpu_custom_call.1} parent=39 // pred_fallthru
          _
      $region40: #{tpu_custom_call.1} parent=5 // pred_fallthru
        _
      %p474 = scmp.le.s32.totalorder 2, %s15
      // Predicated region
      $region49: #{tpu_custom_call.1} parent=5 // pred_check
        %p475 = pneg %p474
      $region50: #{tpu_custom_call.1} parent=5 // pred_check_branch
        %477 = sbr.rel (%p475) target = $region52
      $region51: #{tpu_custom_call.1} parent=5 // pred_region
        %s478 = ssub.s32 %s15, 2
        // Predicated region
        $region53: #{tpu_custom_call.1} parent=51 // pred_check
          %p479 = pneg %p154
        $region54: #{tpu_custom_call.1} parent=51 // pred_check_branch
          %481 = sbr.rel (%p479) target = $region56
        $region55: #{tpu_custom_call.1} parent=51 // pred_region
          %s482 = sand.u32 %s139, 1
          %s483 = scalar_lea.sflag [#allocation4], %s482
          %s484 = sand.u32 %s139, 1
          %s485 = smul.addr %s484, 8
          %s486 = scalar_lea.vmem [#allocation5], %s485
          %487 = dma.done %s483, 128
        $region56: #{tpu_custom_call.1} parent=51 // pred_fallthru
          _
      $region52: #{tpu_custom_call.1} parent=5 // pred_fallthru
        _
    $region6: #{tpu_custom_call.1} parent=1 // loop_footer
      %s19 = sadd.s32 1, %s15
    $region7: #{tpu_custom_call.1} parent=1 // loop_footer_branch
      %14 = sbr.rel target = $region3
    $region8: #{tpu_custom_call.1} parent=1 // loop_exit
      _
    %488 = vsyncpa [#allocation3], 1
    %s489 = scalar_lea.sflag [#allocation3], 1
    %490 = vsyncpa %s489, 1
    %491 = vsyncpa [#allocation4], 1
    %s492 = scalar_lea.sflag [#allocation4], 1
    %493 = vsyncpa %s492, 1

</llo_original>
